<compile_context>
chip_gen: v5e
topology: v5e:2x2
jax: 0.10.0
libtpu: 0.0.40
codegen_flags: <defaults>
</compile_context>

<pallas_src>
import functools

import jax
import jax.numpy as jnp
from jax.experimental import pallas as pl
from jax.experimental.pallas import tpu as pltpu


def _round_up(x: int, m: int) -> int:
    return (x + m - 1) // m * m


def _mlp_kernel(x_ref, w1_ref, b1_ref, w2_ref, b2_ref, w3_ref, b3_ref, o_ref):
    # One batch tile per grid step; weights/biases are resident across steps.
    x = x_ref[...]

    # Layer 1: Linear + ReLU (MXU matmul, f32 accumulation; ReLU on VPU).
    h1 = jnp.dot(x, w1_ref[...], preferred_element_type=jnp.float32)
    h1 = jnp.maximum(h1 + b1_ref[...], 0.0)
    # Layer 2: Linear + ReLU.
    h2 = jnp.dot(h1, w2_ref[...], preferred_element_type=jnp.float32)
    h2 = jnp.maximum(h2 + b2_ref[...], 0.0)
    # Projection (no activation).
    out = jnp.dot(h2, w3_ref[...], preferred_element_type=jnp.float32)
    o_ref[...] = (out + b3_ref[...]).astype(o_ref.dtype)


@functools.partial(jax.jit, static_argnames=("tb",))
def baseline_fc_forward(x, w1, b1, w2, b2, w3, b3, *, tb=1024):
    """Fused forward pass of BaselineFCModel.

    x:  (B, in_features)            float32
    w1: (in_features, 2*in)         b1: (1, 2*in)
    w2: (2*in, 256)                 b2: (1, 256)
    w3: (256, out_features)         b3: (1, out_features)
    returns (B, out_features)       float32
    """
    B, f_in = x.shape
    h1_dim = w1.shape[1]
    h2_dim = w2.shape[1]
    out_features = w3.shape[1]

    # --- Batch tiling (no padding anywhere):
    #   * tile rows are a multiple of 8 (sublane alignment),
    #   * cap the tile so the grid has >= 2 steps when the batch is large
    #     enough (pipelining + megacore split); tiny batches use one block,
    #   * the final partial block is masked on write by Pallas.
    tb = _round_up(max(int(tb), 8), 8)
    tb_eff = min(tb, max(8, _round_up(pl.cdiv(B, 2), 8)))
    grid = (pl.cdiv(B, tb_eff),)

    flops = 2 * B * (f_in * h1_dim + h1_dim * h2_dim + h2_dim * out_features)
    bytes_accessed = 4 * (
        B * f_in                              # x
        + f_in * h1_dim + h1_dim              # w1, b1
        + h1_dim * h2_dim + h2_dim            # w2, b2
        + h2_dim * out_features + out_features  # w3, b3
        + B * out_features                    # out
    )
    cost = pl.CostEstimate(flops=flops, transcendentals=0,
                           bytes_accessed=bytes_accessed)

    return pl.pallas_call(
        _mlp_kernel,
        out_shape=jax.ShapeDtypeStruct((B, out_features), jnp.float32),
        grid=grid,
        in_specs=[
            # Batch-tiled activation input (double-buffered / pipelined by
            # Pallas). Last dim = full extent -> no lane padding needed.
            pl.BlockSpec((tb_eff, f_in), lambda i: (i, 0)),
            # Weights / biases: constant index_map -> resident in VMEM.
            pl.BlockSpec((f_in, h1_dim), lambda i: (0, 0)),
            pl.BlockSpec((1, h1_dim), lambda i: (0, 0)),
            pl.BlockSpec((h1_dim, h2_dim), lambda i: (0, 0)),
            pl.BlockSpec((1, h2_dim), lambda i: (0, 0)),
            pl.BlockSpec((h2_dim, out_features), lambda i: (0, 0)),
            pl.BlockSpec((1, out_features), lambda i: (0, 0)),
        ],
        out_specs=pl.BlockSpec((tb_eff, out_features), lambda i: (i, 0)),
        compiler_params=pltpu.CompilerParams(
            dimension_semantics=("parallel",)),
        cost_estimate=cost,
    )(x, w1, b1, w2, b2, w3, b3)


def init_params(key, in_features, out_features):
    """Deterministic params mimicking torch nn.Linear default init
    (uniform(-1/sqrt(fan_in), 1/sqrt(fan_in))), stored as (in, out)."""
    dims = [(in_features, in_features * 2),
            (in_features * 2, 256),
            (256, out_features)]
    params = []
    for (fan_in, fan_out) in dims:
        key, kw, kb = jax.random.split(key, 3)
        bound = 1.0 / jnp.sqrt(fan_in)
        w = jax.random.uniform(kw, (fan_in, fan_out), jnp.float32, -bound, bound)
        b = jax.random.uniform(kb, (1, fan_out), jnp.float32, -bound, bound)
        params += [w, b]
    return params


def _ref_forward(x, w1, b1, w2, b2, w3, b3):
    h1 = jnp.maximum(x @ w1 + b1, 0.0)
    h2 = jnp.maximum(h1 @ w2 + b2, 0.0)
    return h2 @ w3 + b3


if __name__ == "__main__":
    # settings consistent with the module:
    # in_features  = in_var * input_len / step_size = 4 * 8 / 1 = 32
    # out_features = output_len * out_var           = 8 * 2     = 16
    settings = dict(in_var=4, input_len=8, step_size=1, output_len=8, out_var=2)
    in_features = int(settings["in_var"] * settings["input_len"] / settings["step_size"])
    out_features = int(settings["output_len"] * settings["out_var"])

    key = jax.random.PRNGKey(0)
    key, kx = jax.random.split(key)
    w1, b1, w2, b2, w3, b3 = init_params(key, in_features, out_features)

    # --- Small-batch check (single grid step, masked partial block: B=2 < 8).
    batch = 2
    x = jax.random.normal(kx, (batch, in_features), jnp.float32)
    out = baseline_fc_forward(x, w1, b1, w2, b2, w3, b3)
    out = jax.block_until_ready(out)
    ref = _ref_forward(x, w1, b1, w2, b2, w3, b3)
    assert out.shape == (batch, out_features)
    assert jnp.allclose(out, ref, atol=1e-5, rtol=1e-5)

    # --- Default-tile check (tb capped so the grid has 2 steps for B=300).
    key, kx2 = jax.random.split(key)
    batch2 = 300
    x2 = jax.random.normal(kx2, (batch2, in_features), jnp.float32)
    out2 = baseline_fc_forward(x2, w1, b1, w2, b2, w3, b3)
    out2 = jax.block_until_ready(out2)
    ref2 = _ref_forward(x2, w1, b1, w2, b2, w3, b3)
    assert out2.shape == (batch2, out_features)
    assert jnp.allclose(out2, ref2, atol=1e-5, rtol=1e-5)

    # --- Multi-tile check with a ragged final block (3 steps of 128, last 44).
    out3 = baseline_fc_forward(x2, w1, b1, w2, b2, w3, b3, tb=128)
    out3 = jax.block_until_ready(out3)
    assert out3.shape == (batch2, out_features)
    assert jnp.allclose(out3, ref2, atol=1e-5, rtol=1e-5)

    print("KERNEL_OK")
</pallas_src>

<mosaic_0001>
module attributes {stable_mosaic.version = 11 : i64} {
  func.func @_mlp_kernel(%arg0: i32, %arg1: memref<8x32xf32, #tpu.memory_space<vmem>>, %arg2: memref<32x64xf32, #tpu.memory_space<vmem>>, %arg3: memref<1x64xf32, #tpu.memory_space<vmem>>, %arg4: memref<64x256xf32, #tpu.memory_space<vmem>>, %arg5: memref<1x256xf32, #tpu.memory_space<vmem>>, %arg6: memref<256x16xf32, #tpu.memory_space<vmem>>, %arg7: memref<1x16xf32, #tpu.memory_space<vmem>>, %arg8: memref<8x16xf32, #tpu.memory_space<vmem>>) attributes {dimension_semantics = [#tpu.dimension_semantics<parallel>], iteration_bounds = array<i64: 1>, scalar_prefetch = 0 : i64, scratch_operands = 0 : i64, tpu.core_type = #tpu.core_type<tc>, window_params = [{transform_indices = @transform_0, window_bounds = array<i64: 8, 32>}, {pipeline_mode = #tpu.pipeline_mode<synchronous>, transform_indices = @transform_1, window_bounds = array<i64: 32, 64>}, {pipeline_mode = #tpu.pipeline_mode<synchronous>, transform_indices = @transform_2, window_bounds = array<i64: 1, 64>}, {pipeline_mode = #tpu.pipeline_mode<synchronous>, transform_indices = @transform_3, window_bounds = array<i64: 64, 256>}, {pipeline_mode = #tpu.pipeline_mode<synchronous>, transform_indices = @transform_4, window_bounds = array<i64: 1, 256>}, {pipeline_mode = #tpu.pipeline_mode<synchronous>, transform_indices = @transform_5, window_bounds = array<i64: 256, 16>}, {pipeline_mode = #tpu.pipeline_mode<synchronous>, transform_indices = @transform_6, window_bounds = array<i64: 1, 16>}, {transform_indices = @transform_7, window_bounds = array<i64: 8, 16>}]} {
    %c0 = arith.constant 0 : index
    %c0_0 = arith.constant 0 : index
    %0 = vector.load %arg1[%c0, %c0_0] : memref<8x32xf32, #tpu.memory_space<vmem>>, vector<8x32xf32>
    %c0_1 = arith.constant 0 : index
    %c0_2 = arith.constant 0 : index
    %1 = vector.load %arg2[%c0_1, %c0_2] : memref<32x64xf32, #tpu.memory_space<vmem>>, vector<32x64xf32>
    %cst = arith.constant dense<0.000000e+00> : vector<8x64xf32>
    %2 = tpu.matmul %0, %1, %cst {dimension_numbers = #tpu.dot_dimension_numbers<[1], [0], [0], [1], [0, 0, 1, 1], [], []>} : vector<8x32xf32>, vector<32x64xf32>, vector<8x64xf32> -> vector<8x64xf32>
    %c0_3 = arith.constant 0 : index
    %c0_4 = arith.constant 0 : index
    %3 = vector.load %arg3[%c0_3, %c0_4] : memref<1x64xf32, #tpu.memory_space<vmem>>, vector<1x64xf32>
    %4 = vector.broadcast %3 : vector<1x64xf32> to vector<8x64xf32>
    %5 = arith.addf %2, %4 : vector<8x64xf32>
    %cst_5 = arith.constant 0.000000e+00 : f32
    %6 = vector.broadcast %cst_5 : f32 to vector<8x64xf32>
    %7 = arith.maximumf %5, %6 : vector<8x64xf32>
    %c0_6 = arith.constant 0 : index
    %c0_7 = arith.constant 0 : index
    %8 = vector.load %arg4[%c0_6, %c0_7] : memref<64x256xf32, #tpu.memory_space<vmem>>, vector<64x256xf32>
    %cst_8 = arith.constant dense<0.000000e+00> : vector<8x256xf32>
    %9 = tpu.matmul %7, %8, %cst_8 {dimension_numbers = #tpu.dot_dimension_numbers<[1], [0], [0], [1], [0, 0, 1, 1], [], []>} : vector<8x64xf32>, vector<64x256xf32>, vector<8x256xf32> -> vector<8x256xf32>
    %c0_9 = arith.constant 0 : index
    %c0_10 = arith.constant 0 : index
    %10 = vector.load %arg5[%c0_9, %c0_10] : memref<1x256xf32, #tpu.memory_space<vmem>>, vector<1x256xf32>
    %11 = vector.broadcast %10 : vector<1x256xf32> to vector<8x256xf32>
    %12 = arith.addf %9, %11 : vector<8x256xf32>
    %cst_11 = arith.constant 0.000000e+00 : f32
    %13 = vector.broadcast %cst_11 : f32 to vector<8x256xf32>
    %14 = arith.maximumf %12, %13 : vector<8x256xf32>
    %c0_12 = arith.constant 0 : index
    %c0_13 = arith.constant 0 : index
    %15 = vector.load %arg6[%c0_12, %c0_13] : memref<256x16xf32, #tpu.memory_space<vmem>>, vector<256x16xf32>
    %cst_14 = arith.constant dense<0.000000e+00> : vector<8x16xf32>
    %16 = tpu.matmul %14, %15, %cst_14 {dimension_numbers = #tpu.dot_dimension_numbers<[1], [0], [0], [1], [0, 0, 1, 1], [], []>} : vector<8x256xf32>, vector<256x16xf32>, vector<8x16xf32> -> vector<8x16xf32>
    %c0_15 = arith.constant 0 : index
    %c0_16 = arith.constant 0 : index
    %17 = vector.load %arg7[%c0_15, %c0_16] : memref<1x16xf32, #tpu.memory_space<vmem>>, vector<1x16xf32>
    %18 = vector.broadcast %17 : vector<1x16xf32> to vector<8x16xf32>
    %19 = arith.addf %16, %18 : vector<8x16xf32>
    %c0_17 = arith.constant 0 : index
    %c0_18 = arith.constant 0 : index
    %20 = vector.load %arg8[%c0_17, %c0_18] : memref<8x16xf32, #tpu.memory_space<vmem>>, vector<8x16xf32>
    tpu.vector_store %arg8[%c0_17, %c0_18], %19 {strides = array<i32>} : memref<8x16xf32, #tpu.memory_space<vmem>>, vector<8x16xf32>,
    return
  }
  func.func @transform_0(%arg0: i32) -> (i32, i32) {
    %c0_i32 = arith.constant 0 : i32
    %c0_i32_0 = arith.constant 0 : i32
    return %arg0, %c0_i32 : i32, i32
  }
  func.func @transform_1(%arg0: i32) -> (i32, i32) {
    %c0_i32 = arith.constant 0 : i32
    %c0_i32_0 = arith.constant 0 : i32
    %c0_i32_1 = arith.constant 0 : i32
    return %c0_i32, %c0_i32_0 : i32, i32
  }
  func.func @transform_2(%arg0: i32) -> (i32, i32) {
    %c0_i32 = arith.constant 0 : i32
    %c0_i32_0 = arith.constant 0 : i32
    %c0_i32_1 = arith.constant 0 : i32
    return %c0_i32, %c0_i32_0 : i32, i32
  }
  func.func @transform_3(%arg0: i32) -> (i32, i32) {
    %c0_i32 = arith.constant 0 : i32
    %c0_i32_0 = arith.constant 0 : i32
    %c0_i32_1 = arith.constant 0 : i32
    return %c0_i32, %c0_i32_0 : i32, i32
  }
  func.func @transform_4(%arg0: i32) -> (i32, i32) {
    %c0_i32 = arith.constant 0 : i32
    %c0_i32_0 = arith.constant 0 : i32
    %c0_i32_1 = arith.constant 0 : i32
    return %c0_i32, %c0_i32_0 : i32, i32
  }
  func.func @transform_5(%arg0: i32) -> (i32, i32) {
    %c0_i32 = arith.constant 0 : i32
    %c0_i32_0 = arith.constant 0 : i32
    %c0_i32_1 = arith.constant 0 : i32
    return %c0_i32, %c0_i32_0 : i32, i32
  }
  func.func @transform_6(%arg0: i32) -> (i32, i32) {
    %c0_i32 = arith.constant 0 : i32
    %c0_i32_0 = arith.constant 0 : i32
    %c0_i32_1 = arith.constant 0 : i32
    return %c0_i32, %c0_i32_0 : i32, i32
  }
  func.func @transform_7(%arg0: i32) -> (i32, i32) {
    %c0_i32 = arith.constant 0 : i32
    %c0_i32_0 = arith.constant 0 : i32
    return %arg0, %c0_i32 : i32, i32
  }
}

</mosaic_0001>

<llo_original>
// kernel: baseline_fc_forward.1
$region0: #{baseline_fc_forward.1}
  #allocation0 [shape = 'u32[]', space=smem, size = 0x4, offset = 0x4, fixed_abs, tag = 'smem constant byte address 0x4 - core index']
  #allocation1 [shape = 'u32[72,128]{1,0:T(1,128)}', space=vmem, size = 0x9000, scoped, tag = 'internal scratch']
  %s0 = inlined_call_operand.vmem [shape: f32[2,32], index: 0, kind: input, shape index: {}]
  %s1 = inlined_call_operand.vmem [shape: f32[32,64], index: 1, kind: input, shape index: {}]
  %s2 = inlined_call_operand.vmem [shape: f32[1,64], index: 2, kind: input, shape index: {}]
  %s3 = inlined_call_operand.vmem [shape: f32[64,256], index: 3, kind: input, shape index: {}]
  %s4 = inlined_call_operand.vmem [shape: f32[1,256], index: 4, kind: input, shape index: {}]
  %s5 = inlined_call_operand.vmem [shape: f32[256,16], index: 5, kind: input, shape index: {}]
  %s6 = inlined_call_operand.vmem [shape: f32[1,16], index: 6, kind: input, shape index: {}]
  %s7 = inlined_call_operand.hbm [shape: f32[2,16], index: 7, kind: output, shape index: {}]
  %s8 = sld [smem:[#allocation0]]
  $region38: #{baseline_fc_forward.1} parent=0
    _
  %s10 = ssub.s32 1, %s8
  %s11 = scalar_select 0, %s10, %s8
  $region1: #{baseline_fc_forward.1} parent=0
    #allocation2 [shape = 'u8[4096]{0}', space=vmem, size = 0x1000, scoped, tag = 'output window, operand 0, single buffered']
    #allocation3 [shape = 's32[1]{0}', space=sflag, size = 0x4, scoped, tag = 'scoped memory for baseline_fc_forward.1']
    %12 = vsyncpa [#allocation3], 0
    // Predicated region
    $region2: #{baseline_fc_forward.1} parent=1 // pred_check
      _
    $region3: #{baseline_fc_forward.1} parent=1 // pred_check_branch
      %14 = sbr.rel (0) target = $region5
    $region4: #{baseline_fc_forward.1} parent=1 // pred_region
      _
    $region5: #{baseline_fc_forward.1} parent=1 // pred_fallthru
      _
    // Predicated region
    $region6: #{baseline_fc_forward.1} parent=1 // pred_check
      _
    $region7: #{baseline_fc_forward.1} parent=1 // pred_check_branch
      %16 = sbr.rel (0) target = $region9
    $region8: #{baseline_fc_forward.1} parent=1 // pred_region
      _
    $region9: #{baseline_fc_forward.1} parent=1 // pred_fallthru
      _
    // Predicated region
    $region10: #{baseline_fc_forward.1} parent=1 // pred_check
      _
    $region11: #{baseline_fc_forward.1} parent=1 // pred_check_branch
      %18 = sbr.rel (0) target = $region13
    $region12: #{baseline_fc_forward.1} parent=1 // pred_region
      _
    $region13: #{baseline_fc_forward.1} parent=1 // pred_fallthru
      _
    // Predicated region
    $region14: #{baseline_fc_forward.1} parent=1 // pred_check
      _
    $region15: #{baseline_fc_forward.1} parent=1 // pred_check_branch
      %20 = sbr.rel (0) target = $region17
    $region16: #{baseline_fc_forward.1} parent=1 // pred_region
      _
    $region17: #{baseline_fc_forward.1} parent=1 // pred_fallthru
      _
    // Predicated region
    $region18: #{baseline_fc_forward.1} parent=1 // pred_check
      _
    $region19: #{baseline_fc_forward.1} parent=1 // pred_check_branch
      %22 = sbr.rel (0) target = $region21
    $region20: #{baseline_fc_forward.1} parent=1 // pred_region
      _
    $region21: #{baseline_fc_forward.1} parent=1 // pred_fallthru
      _
    // Predicated region
    $region22: #{baseline_fc_forward.1} parent=1 // pred_check
      _
    $region23: #{baseline_fc_forward.1} parent=1 // pred_check_branch
      %24 = sbr.rel (0) target = $region25
    $region24: #{baseline_fc_forward.1} parent=1 // pred_region
      _
    $region25: #{baseline_fc_forward.1} parent=1 // pred_fallthru
      _
    // Predicated region
    $region26: #{baseline_fc_forward.1} parent=1 // pred_check
      _
    $region27: #{baseline_fc_forward.1} parent=1 // pred_check_branch
      %26 = sbr.rel (0) target = $region29
    $region28: #{baseline_fc_forward.1} parent=1 // pred_region
      _
    $region29: #{baseline_fc_forward.1} parent=1 // pred_fallthru
      _
    %v27 = vld [vmem:[%s0] sm:$0xff]
    %v28 = vld [vmem:[%s1] sm:$0xff]
    %v29 = vld [vmem:[%s1 + $0x8] sm:$0xff]
    %v30 = vld [vmem:[%s1 + $0x10] sm:$0xff]
    %v31 = vld [vmem:[%s1 + $0x18] sm:$0xff]
    %v32 = vld [vmem:[%s2] sm:$0x1]
    %v34 = vperm.slane %v32, 0
    %vm36 = vcmask 261120
    %v38 = vsel %vm36, %v27, 0
    %40 = vmatpush.msra.mxu0 0.0
    %41 = vmatpush.msra.mxu0 0.0
    %42 = vmatpush.msra.mxu0 0.0
    %43 = vmatpush.msra.mxu0 0.0
    %44 = vmatpush.msra.mxu0 0.0
    %45 = vmatpush.msra.mxu0 0.0
    %46 = vmatpush.msra.mxu0 0.0
    %47 = vmatpush.msra.mxu0 0.0
    %48 = vmatpush.msra.mxu0 0.0
    %49 = vmatpush.msra.mxu0 0.0
    %50 = vmatpush.msra.mxu0 0.0
    %51 = vmatpush.msra.mxu0 0.0
    %52 = vmatpush.msra.mxu0 %v31
    %53 = vmatpush.msra.mxu0 %v30
    %54 = vmatpush.msra.mxu0 %v29
    %55 = vmatpush.msra.mxu0 %v28
    %56 = vmatmul.f32.gmra.mxu0 %v38
    %v57 = vpop.f32.mrf.mxu0
    %v58 = vadd.f32 %v34, %v57
    %59 = vdwg.mxu0
    %v60 = vmax.f32 %v58, 0.0
    %v61 = vld [vmem:[%s3] sm:$0xff]
    %v62 = vld [vmem:[%s3 + $0x8] sm:$0xff]
    %v63 = vld [vmem:[%s3 + $0x10] sm:$0xff]
    %v64 = vld [vmem:[%s3 + $0x18] sm:$0xff]
    %v65 = vld [vmem:[%s3 + $0x20] sm:$0xff]
    %v66 = vld [vmem:[%s3 + $0x28] sm:$0xff]
    %v67 = vld [vmem:[%s3 + $0x30] sm:$0xff]
    %v68 = vld [vmem:[%s3 + $0x38] sm:$0xff]
    %v69 = vld [vmem:[%s3 + $0x40] sm:$0xff]
    %v70 = vld [vmem:[%s3 + $0x48] sm:$0xff]
    %v71 = vld [vmem:[%s3 + $0x50] sm:$0xff]
    %v72 = vld [vmem:[%s3 + $0x58] sm:$0xff]
    %v73 = vld [vmem:[%s3 + $0x60] sm:$0xff]
    %v74 = vld [vmem:[%s3 + $0x68] sm:$0xff]
    %v75 = vld [vmem:[%s3 + $0x70] sm:$0xff]
    %v76 = vld [vmem:[%s3 + $0x78] sm:$0xff]
    %v77 = vld [vmem:[%s4] sm:$0x3]
    %v79 = vperm.slane %v77, 0
    %v80 = vperm.slane %v77, 1
    %vm83 = vcmask 523264
    %v85 = vsel %vm83, %v60, 0
    %87 = vmatpush.msra.mxu0 0.0
    %88 = vmatpush.msra.mxu0 0.0
    %89 = vmatpush.msra.mxu0 0.0
    %90 = vmatpush.msra.mxu0 0.0
    %91 = vmatpush.msra.mxu0 0.0
    %92 = vmatpush.msra.mxu0 0.0
    %93 = vmatpush.msra.mxu0 0.0
    %94 = vmatpush.msra.mxu0 0.0
    %95 = vmatpush.msra.mxu0 %v75
    %96 = vmatpush.msra.mxu0 %v73
    %97 = vmatpush.msra.mxu0 %v71
    %98 = vmatpush.msra.mxu0 %v69
    %99 = vmatpush.msra.mxu0 %v67
    %100 = vmatpush.msra.mxu0 %v65
    %101 = vmatpush.msra.mxu0 %v63
    %102 = vmatpush.msra.mxu0 %v61
    %103 = vmatmul.f32.gmra.mxu0 %v85
    %v104 = vpop.f32.mrf.mxu0
    %v105 = vadd.f32 %v79, %v104
    %106 = vdwg.mxu0
    %107 = vmatpush.msra.mxu0 0.0
    %108 = vmatpush.msra.mxu0 0.0
    %109 = vmatpush.msra.mxu0 0.0
    %110 = vmatpush.msra.mxu0 0.0
    %111 = vmatpush.msra.mxu0 0.0
    %112 = vmatpush.msra.mxu0 0.0
    %113 = vmatpush.msra.mxu0 0.0
    %114 = vmatpush.msra.mxu0 0.0
    %115 = vmatpush.msra.mxu0 %v76
    %116 = vmatpush.msra.mxu0 %v74
    %117 = vmatpush.msra.mxu0 %v72
    %118 = vmatpush.msra.mxu0 %v70
    %119 = vmatpush.msra.mxu0 %v68
    %120 = vmatpush.msra.mxu0 %v66
    %121 = vmatpush.msra.mxu0 %v64
    %122 = vmatpush.msra.mxu0 %v62
    %123 = vmatmul.f32.gmra.mxu0 %v85
    %v124 = vpop.f32.mrf.mxu0
    %v125 = vadd.f32 %v80, %v124
    %126 = vdwg.mxu0
    %v127 = vmax.f32 %v105, 0.0
    %v128 = vmax.f32 %v125, 0.0
    %v129 = vld [vmem:[%s5] sm:$0xff]
    %v130 = vld [vmem:[%s5 + $0x8] sm:$0xff]
    %v131 = vld [vmem:[%s5 + $0x10] sm:$0xff]
    %v132 = vld [vmem:[%s5 + $0x18] sm:$0xff]
    %v133 = vld [vmem:[%s5 + $0x20] sm:$0xff]
    %v134 = vld [vmem:[%s5 + $0x28] sm:$0xff]
    %v135 = vld [vmem:[%s5 + $0x30] sm:$0xff]
    %v136 = vld [vmem:[%s5 + $0x38] sm:$0xff]
    %v137 = vld [vmem:[%s5 + $0x40] sm:$0xff]
    %v138 = vld [vmem:[%s5 + $0x48] sm:$0xff]
    %v139 = vld [vmem:[%s5 + $0x50] sm:$0xff]
    %v140 = vld [vmem:[%s5 + $0x58] sm:$0xff]
    %v141 = vld [vmem:[%s5 + $0x60] sm:$0xff]
    %v142 = vld [vmem:[%s5 + $0x68] sm:$0xff]
    %v143 = vld [vmem:[%s5 + $0x70] sm:$0xff]
    %v144 = vld [vmem:[%s5 + $0x78] sm:$0xff]
    %v145 = vld [vmem:[%s5 + $0x80] sm:$0xff]
    %v146 = vld [vmem:[%s5 + $0x88] sm:$0xff]
    %v147 = vld [vmem:[%s5 + $0x90] sm:$0xff]
    %v148 = vld [vmem:[%s5 + $0x98] sm:$0xff]
    %v149 = vld [vmem:[%s5 + $0xa0] sm:$0xff]
    %v150 = vld [vmem:[%s5 + $0xa8] sm:$0xff]
    %v151 = vld [vmem:[%s5 + $0xb0] sm:$0xff]
    %v152 = vld [vmem:[%s5 + $0xb8] sm:$0xff]
    %v153 = vld [vmem:[%s5 + $0xc0] sm:$0xff]
    %v154 = vld [vmem:[%s5 + $0xc8] sm:$0xff]
    %v155 = vld [vmem:[%s5 + $0xd0] sm:$0xff]
    %v156 = vld [vmem:[%s5 + $0xd8] sm:$0xff]
    %v157 = vld [vmem:[%s5 + $0xe0] sm:$0xff]
    %v158 = vld [vmem:[%s5 + $0xe8] sm:$0xff]
    %v159 = vld [vmem:[%s5 + $0xf0] sm:$0xff]
    %v160 = vld [vmem:[%s5 + $0xf8] sm:$0xff]
    %v161 = vld [vmem:[%s6] sm:$0x1]
    %v163 = vperm.slane %v161, 0
    %165 = vmatpush.msra.mxu0 %v144
    %166 = vmatpush.msra.mxu0 %v143
    %167 = vmatpush.msra.mxu0 %v142
    %168 = vmatpush.msra.mxu0 %v141
    %169 = vmatpush.msra.mxu0 %v140
    %170 = vmatpush.msra.mxu0 %v139
    %171 = vmatpush.msra.mxu0 %v138
    %172 = vmatpush.msra.mxu0 %v137
    %173 = vmatpush.msra.mxu0 %v136
    %174 = vmatpush.msra.mxu0 %v135
    %175 = vmatpush.msra.mxu0 %v134
    %176 = vmatpush.msra.mxu0 %v133
    %177 = vmatpush.msra.mxu0 %v132
    %178 = vmatpush.msra.mxu0 %v131
    %179 = vmatpush.msra.mxu0 %v130
    %180 = vmatpush.msra.mxu0 %v129
    %181 = vmatmul.f32.gmra.mxu0 %v127
    %v182 = vpop.f32.mrf.mxu0
    %v183 = vadd.f32 %v163, %v182
    %184 = vdwg.mxu0
    %185 = vmatpush.msra.mxu0 %v160
    %186 = vmatpush.msra.mxu0 %v159
    %187 = vmatpush.msra.mxu0 %v158
    %188 = vmatpush.msra.mxu0 %v157
    %189 = vmatpush.msra.mxu0 %v156
    %190 = vmatpush.msra.mxu0 %v155
    %191 = vmatpush.msra.mxu0 %v154
    %192 = vmatpush.msra.mxu0 %v153
    %193 = vmatpush.msra.mxu0 %v152
    %194 = vmatpush.msra.mxu0 %v151
    %195 = vmatpush.msra.mxu0 %v150
    %196 = vmatpush.msra.mxu0 %v149
    %197 = vmatpush.msra.mxu0 %v148
    %198 = vmatpush.msra.mxu0 %v147
    %199 = vmatpush.msra.mxu0 %v146
    %200 = vmatpush.msra.mxu0 %v145
    %201 = vmatmul.f32.gmra.mxu0 %v128
    %v202 = vpop.f32.mrf.mxu0
    %v203 = vadd.f32 %v183, %v202
    %204 = vdwg.mxu0
    %vm205 = vcmask 130048
    %206 = vst.msk [vmem:[#allocation2] sm:$0xff] %vm205, %v203
    // Predicated region
    $region30: #{baseline_fc_forward.1} parent=1 // pred_check
      _
    $region31: #{baseline_fc_forward.1} parent=1 // pred_check_branch
      %208 = sbr.rel (0) target = $region33
    $region32: #{baseline_fc_forward.1} parent=1 // pred_region
      %210 = vsyncadd [#allocation3], 96
      %s211 = sshll.u32 [#allocation2], 4
      %s212 = int_to_ptr.vmem [resolvable:$true] %s211
      %s213 = sshll.u32 %s7, 4
      %s214 = int_to_ptr.hbm [resolvable:$true] %s213
      %219 = dma.vmem_to_hbm [thread:$0]  %s212, 32, %s214, [#allocation3], 32, 32, 2
    $region33: #{baseline_fc_forward.1} parent=1 // pred_fallthru
      _
    // Predicated region
    $region34: #{baseline_fc_forward.1} parent=1 // pred_check
      _
    $region35: #{baseline_fc_forward.1} parent=1 // pred_check_branch
      %221 = sbr.rel (0) target = $region37
    $region36: #{baseline_fc_forward.1} parent=1 // pred_region
      %223 = dma.done [#allocation3], 128
    $region37: #{baseline_fc_forward.1} parent=1 // pred_fallthru
      _
    %224 = vsyncpa [#allocation3], 1

</llo_original>
